<compile_context>
chip_gen: v5e
topology: v5e:2x2
jax: 0.10.0
libtpu: 0.0.40
codegen_flags: <defaults>
</compile_context>

<pallas_src>
from typing import Dict, Optional, Union

import jax
import jax.numpy as jnp
from jax.experimental import pallas as pl
from jax.experimental.pallas import tpu as pltpu


def _round_up(x: int, m: int) -> int:
    return ((x + m - 1) // m) * m


# ---------------------------------------------------------------------------
# Pallas kernel: fitting net (tanh MLP) producing per-atom energies for one
# lane-dense tile of atoms.
# ---------------------------------------------------------------------------
def _energy_mlp_kernel(xt_ref, w1t_ref, b1_ref, w2_ref, atom_e_ref):
    # xt_ref:     [F_pad, TILE_M] bf16   (features on sublanes, atoms on lanes)
    # w1t_ref:    [H_pad, F_pad]  bf16
    # b1_ref:     [H_pad, 1]      f32
    # w2_ref:     [H_pad, 1]      f32
    # atom_e_ref: [1, TILE_M]     f32
    h = jnp.dot(w1t_ref[...], xt_ref[...],
                preferred_element_type=jnp.float32)      # MXU: [H_pad, TILE_M] f32
    h = jnp.tanh(h + b1_ref[...])                        # f32 bias (VPU) + tanh (EUP)
    # H -> 1 projection as VPU multiply + sublane reduce: keeps the MXU free
    # and the store lane-dense ([1, TILE_M], full-width vst).
    atom_e_ref[...] = jnp.sum(h * w2_ref[...], axis=0, keepdims=True)


def energy_fitting(xt, w1t, b1_col, w2_col, *, tile_m):
    """xt: [F_pad, M_pad] bf16 -> per-atom energy [1, M_pad] f32 (lane-dense)."""
    F_pad, M_pad = xt.shape
    H_pad = w1t.shape[0]
    n_tiles = M_pad // tile_m
    atom_e = pl.pallas_call(
        _energy_mlp_kernel,
        out_shape=jax.ShapeDtypeStruct((1, M_pad), jnp.float32),
        grid=(n_tiles,),
        in_specs=[
            pl.BlockSpec((F_pad, tile_m), lambda i: (0, i)),   # descriptor tile
            pl.BlockSpec((H_pad, F_pad), lambda i: (0, 0)),    # W1^T (shared)
            pl.BlockSpec((H_pad, 1), lambda i: (0, 0)),        # b1 (column)
            pl.BlockSpec((H_pad, 1), lambda i: (0, 0)),        # w2 (column)
        ],
        out_specs=pl.BlockSpec((1, tile_m), lambda i: (0, i)),  # lane-dense out
        compiler_params=pltpu.CompilerParams(
            dimension_semantics=("parallel",)),                 # both TCs on v7x
    )(xt, w1t, b1_col, w2_col)
    return atom_e


# ---------------------------------------------------------------------------
# Synthetic DeePMD-style energy model (the thing held under model['Default']).
# Descriptor construction (neighbor gather, 1/r env matrix) is plain-JAX glue;
# the MLP hot path is the Pallas kernel above.
# ---------------------------------------------------------------------------
class SyntheticEnergyModel:
    _LANE = 128

    def __init__(self, ntypes=3, nsel=4, type_embed_dim=16, hidden=64):
        k1, k2, k3 = jax.random.split(jax.random.PRNGKey(7), 3)
        self.ntypes = ntypes
        self.nsel = nsel
        self.feat = nsel * 4 + type_embed_dim
        self.hidden = hidden
        self.F_pad = _round_up(self.feat, self._LANE)
        self.H_pad = _round_up(hidden, self._LANE)

        self.type_embed = 0.1 * jax.random.normal(
            k1, (ntypes, type_embed_dim), jnp.float32)
        w1 = 0.1 * jax.random.normal(k2, (self.feat, hidden), jnp.float32)
        w2 = 0.1 * jax.random.normal(k3, (hidden, 1), jnp.float32)

        # Pad + transpose weights once at init; MXU operands stored as bf16,
        # biases / projection kept in f32 (non-matmul math stays f32 on v5e).
        self.w1t = (jnp.zeros((self.H_pad, self.F_pad), jnp.float32)
                    .at[:hidden, :self.feat].set(w1.T)
                    .astype(jnp.bfloat16))
        self.b1_col = jnp.zeros((self.H_pad, 1), jnp.float32)
        self.w2_col = jnp.zeros((self.H_pad, 1), jnp.float32).at[:hidden, :].set(w2)
        self.b2 = jnp.zeros((), jnp.float32)

    def __call__(self, coord, atype, natoms, mapping, shift, selected,
                 selected_type, selected_loc=None, box=None):
        # ----- descriptor construction (glue, plain JAX) -----
        B, nloc, nsel = selected.shape
        idx = selected.reshape(B, nloc * nsel)
        nb = jnp.take_along_axis(coord, idx[..., None], axis=1)
        nb = nb.reshape(B, nloc, nsel, 3) + shift           # periodic image shift
        rel = nb - coord[:, :nloc, None, :]                 # [B, NLOC, NSEL, 3]
        r2 = jnp.sum(rel * rel, axis=-1, keepdims=True) + 1e-6
        inv_r = jax.lax.rsqrt(r2)
        env = jnp.concatenate([inv_r, rel * (inv_r * inv_r)], axis=-1)
        env = env.reshape(B, nloc, nsel * 4)
        temb = self.type_embed[atype]                       # [B, NLOC, Te]
        x = jnp.concatenate([env, temb], axis=-1).astype(jnp.float32)
        # TODO(synk): at production nloc, fuse the neighbor gather / env-matrix
        # construction into the Pallas kernel (scalar-prefetched `selected`)
        # instead of materializing x in HBM.

        # ----- hot path: Pallas fitting net over all B*NLOC atoms at once -----
        M = B * nloc
        tile_m = min(512, _round_up(M, self._LANE))
        M_pad = _round_up(M, tile_m)
        x_flat = x.reshape(M, self.feat)
        x_pad = jnp.pad(x_flat, ((0, M_pad - M), (0, self.F_pad - self.feat)))
        xt = x_pad.T.astype(jnp.bfloat16)                   # [F_pad, M_pad]

        atom_e_pad = energy_fitting(
            xt, self.w1t, self.b1_col, self.w2_col, tile_m=tile_m)  # [1, M_pad]
        atom_e = atom_e_pad[0, :M].reshape(B, nloc) + self.b2
        energy = jnp.sum(atom_e, axis=1, keepdims=True)     # per-frame reduction
        return {"energy": energy,                 # [B, 1]
                "atom_energy": atom_e[..., None]}  # [B, NLOC, 1]


class EnergyStdLoss:
    """Minimal stand-in loss (L2 on total energy, per-atom normalized)."""

    def __init__(self, pref_e=1.0):
        self.pref_e = pref_e

    def __call__(self, model_pred, label, natoms=None, learning_rate=None):
        nloc = natoms[0, 0].astype(jnp.float32)
        diff = (model_pred["energy"] - label["energy"]) / nloc
        l2 = jnp.mean(diff * diff)
        loss = self.pref_e * l2
        more_loss = {"l2_ener_loss": l2, "lr": learning_rate}
        return loss, more_loss


# ---------------------------------------------------------------------------
# ModelWrapper: faithful port of the PyTorch dispatch semantics.
# ---------------------------------------------------------------------------
class ModelWrapper:
    def __init__(self, model, loss=None, model_params=None):
        self.model_params = model_params if model_params is not None else {}
        self.train_infos = {"lr": 0, "step": 0}
        self.multi_task = False
        self.model = {}
        if isinstance(model, dict):
            self.multi_task = True
            for task_key in model:
                self.model[task_key] = model[task_key]
        else:
            self.model["Default"] = model
        self.loss = None
        if loss is not None:
            self.loss = {}
            if isinstance(loss, dict):
                for task_key in loss:
                    self.loss[task_key] = loss[task_key]
            else:
                self.loss["Default"] = loss
        self.inference_only = self.loss is None

    def shared_params(self):
        pass

    def forward(self, coord, atype, natoms, mapping, shift, selected,
                selected_type, selected_loc=None, box=None, cur_lr=None,
                label=None, task_key=None, inference_only=False):
        if not self.multi_task:
            task_key = "Default"
        else:
            assert task_key is not None, (
                f"Multitask model must specify the inference task! "
                f"Supported tasks are {list(self.model.keys())}.")
        model_pred = self.model[task_key](
            coord, atype, natoms, mapping, shift, selected, selected_type,
            selected_loc=selected_loc, box=box)
        if not self.inference_only and (not inference_only):
            loss, more_loss = self.loss[task_key](
                model_pred, label, natoms=natoms, learning_rate=cur_lr)
            return (model_pred, loss, more_loss)
        else:
            return (model_pred, None, None)

    __call__ = forward

    def set_extra_state(self, state: Dict):
        self.model_params = state["model_params"]
        self.train_infos = state["train_infos"]
        return None

    def get_extra_state(self) -> Dict:
        return {"model_params": self.model_params,
                "train_infos": self.train_infos}


# TODO(synk): arbitrary user-supplied model/loss nn.Modules cannot be ported
# generically; a synthetic DeePMD-style energy model + L2 loss is used here.

if __name__ == "__main__":
    B, nloc, nall, nsel, ntypes = 2, 8, 8, 4, 3
    key = jax.random.PRNGKey(0)
    kc, ka = jax.random.split(key, 2)

    coord = jax.random.uniform(kc, (B, nall, 3), jnp.float32, 0.0, 5.0)
    atype = jax.random.randint(ka, (B, nloc), 0, ntypes).astype(jnp.int32)
    natoms = jnp.tile(
        jnp.array([[nloc, nall, 4, 2, 2]], jnp.int32), (B, 1))       # [B, 2+ntypes]
    mapping = jnp.tile(jnp.arange(nall, dtype=jnp.int32)[None], (B, 1))
    shift = jnp.zeros((B, nloc, nsel, 3), jnp.float32)
    sel = (jnp.arange(nloc)[:, None] + jnp.arange(1, nsel + 1)[None, :]) % nall
    selected = jnp.tile(sel[None].astype(jnp.int32), (B, 1, 1))
    selected_type = jnp.take_along_axis(
        atype, selected.reshape(B, -1), axis=1).reshape(B, nloc, nsel)
    selected_loc = selected
    box = jnp.tile((5.0 * jnp.eye(3, dtype=jnp.float32)).reshape(1, 9), (B, 1))
    cur_lr = jnp.array(1e-3, jnp.float32)
    label = {"energy": jnp.zeros((B, 1), jnp.float32)}

    model = SyntheticEnergyModel(ntypes=ntypes, nsel=nsel)
    wrapper = ModelWrapper(model, loss=EnergyStdLoss(),
                           model_params={"type_map": ["A", "B", "C"]})

    # Training-style call: returns (model_pred, loss, more_loss).
    model_pred, loss, more_loss = wrapper(
        coord, atype, natoms, mapping, shift, selected, selected_type,
        selected_loc=selected_loc, box=box, cur_lr=cur_lr, label=label)
    jax.block_until_ready(model_pred["energy"])
    jax.block_until_ready(model_pred["atom_energy"])
    jax.block_until_ready(loss)

    # Inference-only call: returns (model_pred, None, None).
    pred2, l2, ml2 = wrapper(
        coord, atype, natoms, mapping, shift, selected, selected_type,
        selected_loc=selected_loc, box=box, inference_only=True)
    jax.block_until_ready(pred2["energy"])
    assert l2 is None and ml2 is None
    assert model_pred["energy"].shape == (B, 1)
    assert model_pred["atom_energy"].shape == (B, nloc, 1)

    print("KERNEL_OK")
</pallas_src>

<mosaic_0001>
module attributes {stable_mosaic.version = 11 : i64} {
  func.func @_energy_mlp_kernel(%arg0: i32, %arg1: memref<128x128xbf16, #tpu.memory_space<vmem>>, %arg2: memref<128x128xbf16, #tpu.memory_space<vmem>>, %arg3: memref<128x1xf32, #tpu.memory_space<vmem>>, %arg4: memref<128x1xf32, #tpu.memory_space<vmem>>, %arg5: memref<1x128xf32, #tpu.memory_space<vmem>>) attributes {dimension_semantics = [#tpu.dimension_semantics<parallel>], iteration_bounds = array<i64: 1>, scalar_prefetch = 0 : i64, scratch_operands = 0 : i64, tpu.core_type = #tpu.core_type<tc>, window_params = [{transform_indices = @transform_0, window_bounds = array<i64: 128, 128>}, {pipeline_mode = #tpu.pipeline_mode<synchronous>, transform_indices = @transform_1, window_bounds = array<i64: 128, 128>}, {pipeline_mode = #tpu.pipeline_mode<synchronous>, transform_indices = @transform_2, window_bounds = array<i64: 128, 1>}, {pipeline_mode = #tpu.pipeline_mode<synchronous>, transform_indices = @transform_3, window_bounds = array<i64: 128, 1>}, {transform_indices = @transform_4, window_bounds = array<i64: 1, 128>}]} {
    %c0 = arith.constant 0 : index
    %c0_0 = arith.constant 0 : index
    %0 = vector.load %arg2[%c0, %c0_0] : memref<128x128xbf16, #tpu.memory_space<vmem>>, vector<128x128xbf16>
    %c0_1 = arith.constant 0 : index
    %c0_2 = arith.constant 0 : index
    %1 = vector.load %arg1[%c0_1, %c0_2] : memref<128x128xbf16, #tpu.memory_space<vmem>>, vector<128x128xbf16>
    %cst = arith.constant dense<0.000000e+00> : vector<128x128xf32>
    %2 = tpu.matmul %0, %1, %cst {dimension_numbers = #tpu.dot_dimension_numbers<[1], [0], [0], [1], [0, 0, 1, 1], [], []>} : vector<128x128xbf16>, vector<128x128xbf16>, vector<128x128xf32> -> vector<128x128xf32>
    %c0_3 = arith.constant 0 : index
    %c0_4 = arith.constant 0 : index
    %3 = vector.load %arg3[%c0_3, %c0_4] : memref<128x1xf32, #tpu.memory_space<vmem>>, vector<128x1xf32>
    %4 = vector.broadcast %3 : vector<128x1xf32> to vector<128x128xf32>
    %5 = arith.addf %2, %4 : vector<128x128xf32>
    %6 = math.tanh %5 : vector<128x128xf32>
    %c0_5 = arith.constant 0 : index
    %c0_6 = arith.constant 0 : index
    %7 = vector.load %arg4[%c0_5, %c0_6] : memref<128x1xf32, #tpu.memory_space<vmem>>, vector<128x1xf32>
    %8 = vector.broadcast %7 : vector<128x1xf32> to vector<128x128xf32>
    %9 = arith.mulf %6, %8 : vector<128x128xf32>
    %cst_7 = arith.constant dense<0.000000e+00> : vector<128xf32>
    %10 = vector.multi_reduction <add>, %9, %cst_7 [0] : vector<128x128xf32> to vector<128xf32>
    %11 = vector.shape_cast %10 : vector<128xf32> to vector<1x128xf32>
    %c0_8 = arith.constant 0 : index
    %c0_9 = arith.constant 0 : index
    %12 = vector.load %arg5[%c0_8, %c0_9] : memref<1x128xf32, #tpu.memory_space<vmem>>, vector<1x128xf32>
    tpu.vector_store %arg5[%c0_8, %c0_9], %11 {strides = array<i32>} : memref<1x128xf32, #tpu.memory_space<vmem>>, vector<1x128xf32>,
    return
  }
  func.func @transform_0(%arg0: i32) -> (i32, i32) {
    %c0_i32 = arith.constant 0 : i32
    %c0_i32_0 = arith.constant 0 : i32
    return %c0_i32, %arg0 : i32, i32
  }
  func.func @transform_1(%arg0: i32) -> (i32, i32) {
    %c0_i32 = arith.constant 0 : i32
    %c0_i32_0 = arith.constant 0 : i32
    %c0_i32_1 = arith.constant 0 : i32
    return %c0_i32, %c0_i32_0 : i32, i32
  }
  func.func @transform_2(%arg0: i32) -> (i32, i32) {
    %c0_i32 = arith.constant 0 : i32
    %c0_i32_0 = arith.constant 0 : i32
    %c0_i32_1 = arith.constant 0 : i32
    return %c0_i32, %c0_i32_0 : i32, i32
  }
  func.func @transform_3(%arg0: i32) -> (i32, i32) {
    %c0_i32 = arith.constant 0 : i32
    %c0_i32_0 = arith.constant 0 : i32
    %c0_i32_1 = arith.constant 0 : i32
    return %c0_i32, %c0_i32_0 : i32, i32
  }
  func.func @transform_4(%arg0: i32) -> (i32, i32) {
    %c0_i32 = arith.constant 0 : i32
    %c0_i32_0 = arith.constant 0 : i32
    return %c0_i32, %arg0 : i32, i32
  }
}

</mosaic_0001>

<llo_original>
// kernel: tpu_custom_call.1
$region0: #{tpu_custom_call.1}
  #allocation0 [shape = 'u32[]', space=smem, size = 0x4, offset = 0x4, fixed_abs, tag = 'smem constant byte address 0x4 - core index']
  #allocation1 [shape = 'u32[72,128]{1,0:T(1,128)}', space=vmem, size = 0x9000, scoped, tag = 'internal scratch']
  %s0 = inlined_call_operand.vmem [shape: bf16[128,128], index: 0, kind: input, shape index: {}]
  %s1 = inlined_call_operand.vmem [shape: bf16[128,128], index: 1, kind: input, shape index: {}]
  %s2 = inlined_call_operand.vmem [shape: f32[128,1], index: 2, kind: input, shape index: {}]
  %s3 = inlined_call_operand.vmem [shape: f32[128,1], index: 3, kind: input, shape index: {}]
  %s4 = inlined_call_operand.hbm [shape: f32[1,128], index: 4, kind: output, shape index: {}]
  %s5 = sld [smem:[#allocation0]]
  $region26: #{tpu_custom_call.1} parent=0
    _
  %s7 = ssub.s32 1, %s5
  %s8 = scalar_select 0, %s7, %s5
  $region1: #{tpu_custom_call.1} parent=0
    #allocation2 [shape = 'u8[512]{0}', space=vmem, size = 0x400, scoped, tag = 'output window, operand 0, single buffered']
    #allocation3 [shape = 's32[1]{0}', space=sflag, size = 0x4, scoped, tag = 'scoped memory for tpu_custom_call.1']
    %9 = vsyncpa [#allocation3], 0
    // Predicated region
    $region2: #{tpu_custom_call.1} parent=1 // pred_check
      _
    $region3: #{tpu_custom_call.1} parent=1 // pred_check_branch
      %11 = sbr.rel (0) target = $region5
    $region4: #{tpu_custom_call.1} parent=1 // pred_region
      _
    $region5: #{tpu_custom_call.1} parent=1 // pred_fallthru
      _
    // Predicated region
    $region6: #{tpu_custom_call.1} parent=1 // pred_check
      _
    $region7: #{tpu_custom_call.1} parent=1 // pred_check_branch
      %13 = sbr.rel (0) target = $region9
    $region8: #{tpu_custom_call.1} parent=1 // pred_region
      _
    $region9: #{tpu_custom_call.1} parent=1 // pred_fallthru
      _
    // Predicated region
    $region10: #{tpu_custom_call.1} parent=1 // pred_check
      _
    $region11: #{tpu_custom_call.1} parent=1 // pred_check_branch
      %15 = sbr.rel (0) target = $region13
    $region12: #{tpu_custom_call.1} parent=1 // pred_region
      _
    $region13: #{tpu_custom_call.1} parent=1 // pred_fallthru
      _
    // Predicated region
    $region14: #{tpu_custom_call.1} parent=1 // pred_check
      _
    $region15: #{tpu_custom_call.1} parent=1 // pred_check_branch
      %17 = sbr.rel (0) target = $region17
    $region16: #{tpu_custom_call.1} parent=1 // pred_region
      _
    $region17: #{tpu_custom_call.1} parent=1 // pred_fallthru
      _
    %v18 = vld [vmem:[%s1] sm:$0xf]
    %v19 = vld [vmem:[%s1 + $0x4] sm:$0xf]
    %v20 = vld [vmem:[%s1 + $0x8] sm:$0xf]
    %v21 = vld [vmem:[%s1 + $0xc] sm:$0xf]
    %v22 = vld [vmem:[%s1 + $0x10] sm:$0xf]
    %v23 = vld [vmem:[%s1 + $0x14] sm:$0xf]
    %v24 = vld [vmem:[%s1 + $0x18] sm:$0xf]
    %v25 = vld [vmem:[%s1 + $0x1c] sm:$0xf]
    %v26 = vld [vmem:[%s1 + $0x20] sm:$0xf]
    %v27 = vld [vmem:[%s1 + $0x24] sm:$0xf]
    %v28 = vld [vmem:[%s1 + $0x28] sm:$0xf]
    %v29 = vld [vmem:[%s1 + $0x2c] sm:$0xf]
    %v30 = vld [vmem:[%s1 + $0x30] sm:$0xf]
    %v31 = vld [vmem:[%s1 + $0x34] sm:$0xf]
    %v32 = vld [vmem:[%s1 + $0x38] sm:$0xf]
    %v33 = vld [vmem:[%s1 + $0x3c] sm:$0xf]
    %v34 = vld [vmem:[%s0] sm:$0xf]
    %v35 = vld [vmem:[%s0 + $0x4] sm:$0xf]
    %v36 = vld [vmem:[%s0 + $0x8] sm:$0xf]
    %v37 = vld [vmem:[%s0 + $0xc] sm:$0xf]
    %v38 = vld [vmem:[%s0 + $0x10] sm:$0xf]
    %v39 = vld [vmem:[%s0 + $0x14] sm:$0xf]
    %v40 = vld [vmem:[%s0 + $0x18] sm:$0xf]
    %v41 = vld [vmem:[%s0 + $0x1c] sm:$0xf]
    %v42 = vld [vmem:[%s0 + $0x20] sm:$0xf]
    %v43 = vld [vmem:[%s0 + $0x24] sm:$0xf]
    %v44 = vld [vmem:[%s0 + $0x28] sm:$0xf]
    %v45 = vld [vmem:[%s0 + $0x2c] sm:$0xf]
    %v46 = vld [vmem:[%s0 + $0x30] sm:$0xf]
    %v47 = vld [vmem:[%s0 + $0x34] sm:$0xf]
    %v48 = vld [vmem:[%s0 + $0x38] sm:$0xf]
    %v49 = vld [vmem:[%s0 + $0x3c] sm:$0xf]
    %v50 = vld [vmem:[%s2] sm:$0xff]
    %v51 = vld [vmem:[%s2 + $0x8] sm:$0xff]
    %v52 = vld [vmem:[%s2 + $0x10] sm:$0xff]
    %v53 = vld [vmem:[%s2 + $0x18] sm:$0xff]
    %v54 = vld [vmem:[%s2 + $0x20] sm:$0xff]
    %v55 = vld [vmem:[%s2 + $0x28] sm:$0xff]
    %v56 = vld [vmem:[%s2 + $0x30] sm:$0xff]
    %v57 = vld [vmem:[%s2 + $0x38] sm:$0xff]
    %v58 = vld [vmem:[%s2 + $0x40] sm:$0xff]
    %v59 = vld [vmem:[%s2 + $0x48] sm:$0xff]
    %v60 = vld [vmem:[%s2 + $0x50] sm:$0xff]
    %v61 = vld [vmem:[%s2 + $0x58] sm:$0xff]
    %v62 = vld [vmem:[%s2 + $0x60] sm:$0xff]
    %v63 = vld [vmem:[%s2 + $0x68] sm:$0xff]
    %v64 = vld [vmem:[%s2 + $0x70] sm:$0xff]
    %v65 = vld [vmem:[%s2 + $0x78] sm:$0xff]
    %67 = vset.pattern.permute.xlu0 0
    %68 = vperm.xlu0 %67, %v50
    %v69 = vpop.permute.xlu0 %68
    %72 = vset.pattern.permute.xlu0 0
    %73 = vperm.xlu0 %72, %v51
    %v74 = vpop.permute.xlu0 %73
    %77 = vset.pattern.permute.xlu0 0
    %78 = vperm.xlu0 %77, %v52
    %v79 = vpop.permute.xlu0 %78
    %82 = vset.pattern.permute.xlu0 0
    %83 = vperm.xlu0 %82, %v53
    %v84 = vpop.permute.xlu0 %83
    %87 = vset.pattern.permute.xlu0 0
    %88 = vperm.xlu0 %87, %v54
    %v89 = vpop.permute.xlu0 %88
    %92 = vset.pattern.permute.xlu0 0
    %93 = vperm.xlu0 %92, %v55
    %v94 = vpop.permute.xlu0 %93
    %97 = vset.pattern.permute.xlu0 0
    %98 = vperm.xlu0 %97, %v56
    %v99 = vpop.permute.xlu0 %98
    %102 = vset.pattern.permute.xlu0 0
    %103 = vperm.xlu0 %102, %v57
    %v104 = vpop.permute.xlu0 %103
    %107 = vset.pattern.permute.xlu0 0
    %108 = vperm.xlu0 %107, %v58
    %v109 = vpop.permute.xlu0 %108
    %112 = vset.pattern.permute.xlu0 0
    %113 = vperm.xlu0 %112, %v59
    %v114 = vpop.permute.xlu0 %113
    %117 = vset.pattern.permute.xlu0 0
    %118 = vperm.xlu0 %117, %v60
    %v119 = vpop.permute.xlu0 %118
    %122 = vset.pattern.permute.xlu0 0
    %123 = vperm.xlu0 %122, %v61
    %v124 = vpop.permute.xlu0 %123
    %127 = vset.pattern.permute.xlu0 0
    %128 = vperm.xlu0 %127, %v62
    %v129 = vpop.permute.xlu0 %128
    %132 = vset.pattern.permute.xlu0 0
    %133 = vperm.xlu0 %132, %v63
    %v134 = vpop.permute.xlu0 %133
    %137 = vset.pattern.permute.xlu0 0
    %138 = vperm.xlu0 %137, %v64
    %v139 = vpop.permute.xlu0 %138
    %142 = vset.pattern.permute.xlu0 0
    %143 = vperm.xlu0 %142, %v65
    %v144 = vpop.permute.xlu0 %143
    %v162 = vunpack.c.l.b16 %v18
    %v163 = vunpack.c.l.b16 %v19
    %v164 = vunpack.c.l.b16 %v20
    %v165 = vunpack.c.l.b16 %v21
    %v166 = vunpack.c.l.b16 %v22
    %v167 = vunpack.c.l.b16 %v23
    %v168 = vunpack.c.l.b16 %v24
    %v169 = vunpack.c.l.b16 %v25
    %v170 = vunpack.c.l.b16 %v26
    %v171 = vunpack.c.l.b16 %v27
    %v172 = vunpack.c.l.b16 %v28
    %v173 = vunpack.c.l.b16 %v29
    %v174 = vunpack.c.l.b16 %v30
    %v175 = vunpack.c.l.b16 %v31
    %v176 = vunpack.c.l.b16 %v32
    %v177 = vunpack.c.l.b16 %v33
    %v178 = vpack.c.b16 %v163, %v162
    %v179 = vpack.c.b16 %v165, %v164
    %v180 = vpack.c.b16 %v167, %v166
    %v181 = vpack.c.b16 %v169, %v168
    %v182 = vpack.c.b16 %v171, %v170
    %v183 = vpack.c.b16 %v173, %v172
    %v184 = vpack.c.b16 %v175, %v174
    %v185 = vpack.c.b16 %v177, %v176
    %v210 = vunpack.c.l.b16 %v34
    %v211 = vunpack.c.l.b16 %v35
    %v212 = vunpack.c.l.b16 %v36
    %v213 = vunpack.c.l.b16 %v37
    %v214 = vunpack.c.l.b16 %v38
    %v215 = vunpack.c.l.b16 %v39
    %v216 = vunpack.c.l.b16 %v40
    %v217 = vunpack.c.l.b16 %v41
    %v218 = vunpack.c.l.b16 %v42
    %v219 = vunpack.c.l.b16 %v43
    %v220 = vunpack.c.l.b16 %v44
    %v221 = vunpack.c.l.b16 %v45
    %v222 = vunpack.c.l.b16 %v46
    %v223 = vunpack.c.l.b16 %v47
    %v224 = vunpack.c.l.b16 %v48
    %v225 = vunpack.c.l.b16 %v49
    %v226 = vpack.c.b16 %v211, %v210
    %v227 = vpack.c.b16 %v213, %v212
    %v228 = vpack.c.b16 %v215, %v214
    %v229 = vpack.c.b16 %v217, %v216
    %v230 = vpack.c.b16 %v219, %v218
    %v231 = vpack.c.b16 %v221, %v220
    %v232 = vpack.c.b16 %v223, %v222
    %v233 = vpack.c.b16 %v225, %v224
    %242 = vmatpush.bf16.msra.mxu0 %v233
    %243 = vmatpush.bf16.msra.mxu0 %v232
    %244 = vmatpush.bf16.msra.mxu0 %v231
    %245 = vmatpush.bf16.msra.mxu0 %v230
    %246 = vmatpush.bf16.msra.mxu0 %v229
    %247 = vmatpush.bf16.msra.mxu0 %v228
    %248 = vmatpush.bf16.msra.mxu0 %v227
    %249 = vmatpush.bf16.msra.mxu0 %v226
    %250 = vmatmul.bf16.gmra.mxu0 %v178
    %v251 = vpop.f32.mrf.mxu0
    %v252 = vadd.f32 %v69, %v251
    %v253 = vpop.f32.mrf.mxu0
    %v254 = vadd.f32 %v74, %v253
    %255 = vmatmul.bf16.gmra.mxu0 %v179
    %v256 = vpop.f32.mrf.mxu0
    %v257 = vadd.f32 %v79, %v256
    %v258 = vpop.f32.mrf.mxu0
    %v259 = vadd.f32 %v84, %v258
    %260 = vmatmul.bf16.gmra.mxu0 %v180
    %v261 = vpop.f32.mrf.mxu0
    %v262 = vadd.f32 %v89, %v261
    %v263 = vpop.f32.mrf.mxu0
    %v264 = vadd.f32 %v94, %v263
    %265 = vmatmul.bf16.gmra.mxu0 %v181
    %v266 = vpop.f32.mrf.mxu0
    %v267 = vadd.f32 %v99, %v266
    %v268 = vpop.f32.mrf.mxu0
    %v269 = vadd.f32 %v104, %v268
    %270 = vmatmul.bf16.gmra.mxu0 %v182
    %v271 = vpop.f32.mrf.mxu0
    %v272 = vadd.f32 %v109, %v271
    %v273 = vpop.f32.mrf.mxu0
    %v274 = vadd.f32 %v114, %v273
    %275 = vmatmul.bf16.gmra.mxu0 %v183
    %v276 = vpop.f32.mrf.mxu0
    %v277 = vadd.f32 %v119, %v276
    %v278 = vpop.f32.mrf.mxu0
    %v279 = vadd.f32 %v124, %v278
    %280 = vmatmul.bf16.gmra.mxu0 %v184
    %v281 = vpop.f32.mrf.mxu0
    %v282 = vadd.f32 %v129, %v281
    %v283 = vpop.f32.mrf.mxu0
    %v284 = vadd.f32 %v134, %v283
    %285 = vmatmul.bf16.gmra.mxu0 %v185
    %v286 = vpop.f32.mrf.mxu0
    %v287 = vadd.f32 %v139, %v286
    %v288 = vpop.f32.mrf.mxu0
    %v289 = vadd.f32 %v144, %v288
    %290 = vdwg.mxu0
    %v291 = vtanh.pop %v252
    %v292 = vtanh.pop %v254
    %v293 = vtanh.pop %v257
    %v294 = vtanh.pop %v259
    %v295 = vtanh.pop %v262
    %v296 = vtanh.pop %v264
    %v297 = vtanh.pop %v267
    %v298 = vtanh.pop %v269
    %v299 = vtanh.pop %v272
    %v300 = vtanh.pop %v274
    %v301 = vtanh.pop %v277
    %v302 = vtanh.pop %v279
    %v303 = vtanh.pop %v282
    %v304 = vtanh.pop %v284
    %v305 = vtanh.pop %v287
    %v306 = vtanh.pop %v289
    %v307 = vld [vmem:[%s3] sm:$0xff]
    %v308 = vld [vmem:[%s3 + $0x8] sm:$0xff]
    %v309 = vld [vmem:[%s3 + $0x10] sm:$0xff]
    %v310 = vld [vmem:[%s3 + $0x18] sm:$0xff]
    %v311 = vld [vmem:[%s3 + $0x20] sm:$0xff]
    %v312 = vld [vmem:[%s3 + $0x28] sm:$0xff]
    %v313 = vld [vmem:[%s3 + $0x30] sm:$0xff]
    %v314 = vld [vmem:[%s3 + $0x38] sm:$0xff]
    %v315 = vld [vmem:[%s3 + $0x40] sm:$0xff]
    %v316 = vld [vmem:[%s3 + $0x48] sm:$0xff]
    %v317 = vld [vmem:[%s3 + $0x50] sm:$0xff]
    %v318 = vld [vmem:[%s3 + $0x58] sm:$0xff]
    %v319 = vld [vmem:[%s3 + $0x60] sm:$0xff]
    %v320 = vld [vmem:[%s3 + $0x68] sm:$0xff]
    %v321 = vld [vmem:[%s3 + $0x70] sm:$0xff]
    %v322 = vld [vmem:[%s3 + $0x78] sm:$0xff]
    %324 = vset.pattern.permute.xlu0 0
    %325 = vperm.xlu0 %324, %v307
    %v326 = vpop.permute.xlu0 %325
    %329 = vset.pattern.permute.xlu0 0
    %330 = vperm.xlu0 %329, %v308
    %v331 = vpop.permute.xlu0 %330
    %334 = vset.pattern.permute.xlu0 0
    %335 = vperm.xlu0 %334, %v309
    %v336 = vpop.permute.xlu0 %335
    %339 = vset.pattern.permute.xlu0 0
    %340 = vperm.xlu0 %339, %v310
    %v341 = vpop.permute.xlu0 %340
    %344 = vset.pattern.permute.xlu0 0
    %345 = vperm.xlu0 %344, %v311
    %v346 = vpop.permute.xlu0 %345
    %349 = vset.pattern.permute.xlu0 0
    %350 = vperm.xlu0 %349, %v312
    %v351 = vpop.permute.xlu0 %350
    %354 = vset.pattern.permute.xlu0 0
    %355 = vperm.xlu0 %354, %v313
    %v356 = vpop.permute.xlu0 %355
    %359 = vset.pattern.permute.xlu0 0
    %360 = vperm.xlu0 %359, %v314
    %v361 = vpop.permute.xlu0 %360
    %364 = vset.pattern.permute.xlu0 0
    %365 = vperm.xlu0 %364, %v315
    %v366 = vpop.permute.xlu0 %365
    %369 = vset.pattern.permute.xlu0 0
    %370 = vperm.xlu0 %369, %v316
    %v371 = vpop.permute.xlu0 %370
    %374 = vset.pattern.permute.xlu0 0
    %375 = vperm.xlu0 %374, %v317
    %v376 = vpop.permute.xlu0 %375
    %379 = vset.pattern.permute.xlu0 0
    %380 = vperm.xlu0 %379, %v318
    %v381 = vpop.permute.xlu0 %380
    %384 = vset.pattern.permute.xlu0 0
    %385 = vperm.xlu0 %384, %v319
    %v386 = vpop.permute.xlu0 %385
    %389 = vset.pattern.permute.xlu0 0
    %390 = vperm.xlu0 %389, %v320
    %v391 = vpop.permute.xlu0 %390
    %394 = vset.pattern.permute.xlu0 0
    %395 = vperm.xlu0 %394, %v321
    %v396 = vpop.permute.xlu0 %395
    %399 = vset.pattern.permute.xlu0 0
    %400 = vperm.xlu0 %399, %v322
    %v401 = vpop.permute.xlu0 %400
    %v403 = vmul.f32 %v291, %v326
    %v404 = vmul.f32 %v292, %v331
    %v405 = vmul.f32 %v293, %v336
    %v406 = vmul.f32 %v294, %v341
    %v407 = vmul.f32 %v295, %v346
    %v408 = vmul.f32 %v296, %v351
    %v409 = vmul.f32 %v297, %v356
    %v410 = vmul.f32 %v298, %v361
    %v411 = vmul.f32 %v299, %v366
    %v412 = vmul.f32 %v300, %v371
    %v413 = vmul.f32 %v301, %v376
    %v414 = vmul.f32 %v302, %v381
    %v415 = vmul.f32 %v303, %v386
    %v416 = vmul.f32 %v304, %v391
    %v417 = vmul.f32 %v305, %v396
    %v418 = vmul.f32 %v306, %v401
    %v419 = vadd.f32 %v403, %v404
    %v420 = vadd.f32 %v419, %v405
    %v421 = vadd.f32 %v420, %v406
    %v422 = vadd.f32 %v421, %v407
    %v423 = vadd.f32 %v422, %v408
    %v424 = vadd.f32 %v423, %v409
    %v425 = vadd.f32 %v424, %v410
    %v426 = vadd.f32 %v425, %v411
    %v427 = vadd.f32 %v426, %v412
    %v428 = vadd.f32 %v427, %v413
    %v429 = vadd.f32 %v428, %v414
    %v430 = vadd.f32 %v429, %v415
    %v431 = vadd.f32 %v430, %v416
    %v432 = vadd.f32 %v431, %v417
    %v433 = vadd.f32 %v432, %v418
    %v434 = vrot.slane %v433, 4
    %v435 = vadd.f32 %v433, %v434
    %v436 = vrot.slane %v435, 2
    %v437 = vadd.f32 %v435, %v436
    %v438 = vrot.slane %v437, 1
    %v439 = vadd.f32 %v437, %v438
    %440 = vst [vmem:[#allocation2] sm:$0x1] %v439
    // Predicated region
    $region18: #{tpu_custom_call.1} parent=1 // pred_check
      _
    $region19: #{tpu_custom_call.1} parent=1 // pred_check_branch
      %442 = sbr.rel (0) target = $region21
    $region20: #{tpu_custom_call.1} parent=1 // pred_region
      %444 = vsyncadd [#allocation3], 0
      %s446 = sshll.u32 [#allocation2], 4
      %s447 = int_to_ptr.vmem [resolvable:$true] %s446
      %s448 = sshll.u32 %s4, 4
      %s449 = int_to_ptr.hbm [resolvable:$true] %s448
      %451 = dma.vmem_to_hbm [thread:$0]  %s447, 16, %s449, [#allocation3]
    $region21: #{tpu_custom_call.1} parent=1 // pred_fallthru
      _
    // Predicated region
    $region22: #{tpu_custom_call.1} parent=1 // pred_check
      _
    $region23: #{tpu_custom_call.1} parent=1 // pred_check_branch
      %453 = sbr.rel (0) target = $region25
    $region24: #{tpu_custom_call.1} parent=1 // pred_region
      %455 = dma.done [#allocation3], 16
    $region25: #{tpu_custom_call.1} parent=1 // pred_fallthru
      _
    %456 = vsyncpa [#allocation3], 1

</llo_original>
